<compile_context>
chip_gen: v7x
topology: tpu7x:2x2x1
jax: 0.10.0
libtpu: 0.0.40
codegen_flags: <defaults>
</compile_context>

<pallas_src>
import jax
import jax.numpy as jnp
from jax.experimental import pallas as pl
from jax.experimental.pallas import tpu as pltpu


def _round_up(x, m):
    return ((x + m - 1) // m) * m


def _sigmoid(x):
    # exactly sigmoid, via one EUP tanh and no divide / exp-overflow edge
    return 0.5 * (jnp.tanh(0.5 * x) + 1.0)


# --------------------------------------------------------------------------- #
# Kernel 1: fused MultiAttn (context_info=None) + LSTM cell ("prologue").
# Runs once per decode step; every operand is a whole (small) array in VMEM.
# --------------------------------------------------------------------------- #
def prologue_kernel(x_ref, enc_t_ref, enc_ref, h0_ref, c0_ref,
                    attn_w_ref, attn_b_ref,
                    comb_wx_ref, comb_w1_ref, comb_b_ref,
                    wih_ref, whh_ref, b4_ref,
                    h1_ref, c1_ref, h_bf_ref):
    f32, bf16 = jnp.float32, jnp.bfloat16
    H = h0_ref.shape[-1]

    x = x_ref[...]                                   # (1, E) f32
    xb = x.astype(bf16)

    # MultiAttn: transformed_input = Linear(E -> H)(x)
    ti = jnp.dot(xb, attn_w_ref[...], preferred_element_type=f32) + attn_b_ref[...]   # (1, H)

    # lane-dense scores over T, softmax along the lane axis, MXU context matmul.
    # (the two torch.zeros attention sources give exactly-zero contexts -> dropped, exact)
    scores = jnp.dot(ti, enc_t_ref[...], preferred_element_type=f32)                  # (1, T)
    m = jnp.max(scores, axis=1, keepdims=True)
    e = jnp.exp(scores - m)
    p = e / jnp.sum(e, axis=1, keepdims=True)                                          # exact softmax
    ctx = jnp.dot(p, enc_ref[...], preferred_element_type=f32)                         # (1, H)

    # attn_combine(cat([x, ctx_enc, 0, 0])) -- zero-source weight blocks dropped (exact)
    comb = (jnp.dot(xb, comb_wx_ref[...], preferred_element_type=f32)
            + jnp.dot(ctx.astype(bf16), comb_w1_ref[...], preferred_element_type=f32)
            + comb_b_ref[...])
    attn_out = jnp.tanh(comb)                                                          # (1, E)

    # LSTM cell: two fused gate matmuls, then static lane slices of the (1,4H) gate
    # vector (PyTorch gate order i, f, g, o; slices are vreg-aligned when H % 128 == 0).
    ab = attn_out.astype(bf16)
    h0b = h0_ref[...].astype(bf16)
    gates = (jnp.dot(ab, wih_ref[...], preferred_element_type=f32)
             + jnp.dot(h0b, whh_ref[...], preferred_element_type=f32)
             + b4_ref[...])                                                            # (1, 4H)
    i_g = _sigmoid(gates[:, 0 * H:1 * H])
    f_g = _sigmoid(gates[:, 1 * H:2 * H])
    g_g = jnp.tanh(gates[:, 2 * H:3 * H])
    o_g = _sigmoid(gates[:, 3 * H:4 * H])
    c_new = f_g * c0_ref[...] + i_g * g_g
    h_new = o_g * jnp.tanh(c_new)

    h1_ref[...] = h_new
    c1_ref[...] = c_new
    h_bf_ref[...] = h_new.astype(bf16)               # matmul-dtype copy for the vocab kernel


# --------------------------------------------------------------------------- #
# Kernel 2: output projection, tiled over the vocabulary ("parallel" 1-D grid).
# Each tile writes raw logits plus a per-tile (max, sum-exp) softmax partial.
# --------------------------------------------------------------------------- #
def vocab_kernel(h_ref, out_w_ref, out_b_ref, logits_ref, part_ref):
    f32 = jnp.float32
    logits_t = (jnp.dot(h_ref[...], out_w_ref[...], preferred_element_type=f32)
                + out_b_ref[...])                    # (1, TV)
    logits_ref[...] = logits_t

    # per-tile softmax partials; exact cross-tile reduction happens in the wrapper
    m_j = jnp.max(logits_t, axis=1, keepdims=True)                  # (1, 1)
    s_j = jnp.sum(jnp.exp(logits_t - m_j), axis=1, keepdims=True)   # (1, 1)
    part_ref[...] = jnp.concatenate(
        [jnp.broadcast_to(m_j, (1, 128)), jnp.broadcast_to(s_j, (1, 128))], axis=0)


# --------------------------------------------------------------------------- #
# Parameter construction / one-time preparation
# --------------------------------------------------------------------------- #
def init_params(key, vocab_size, embed_size, hidden_size):
    E, H, V = embed_size, hidden_size, vocab_size
    ks = jax.random.split(key, 12)
    scale = 0.1

    def w(k, shape):
        return jax.random.normal(k, shape, jnp.float32) * scale

    return {
        # MultiAttn.attn: Linear(E, H)
        "attn_w": w(ks[0], (E, H)),
        "attn_b": w(ks[1], (1, H)),
        # MultiAttn.attn_combine: Linear(E + 3H, E), input-dim split into blocks
        # (order matches cat: [input, ctx_encoder, ctx_src2, ctx_src3]).
        # comb_w2/comb_w3 multiply exactly-zero contexts in the context_info=None
        # path, so they are kept only to mirror the module and never enter the kernel.
        "comb_wx": w(ks[2], (E, E)),
        "comb_w1": w(ks[3], (H, E)),
        "comb_w2": w(ks[4], (H, E)),
        "comb_w3": w(ks[5], (H, E)),
        "comb_b": w(ks[6], (1, E)),
        # LSTM(E, H), gate order i, f, g, o (PyTorch), stored transposed vs torch
        "wih": w(ks[7], (E, 4 * H)),
        "bih": w(ks[8], (1, 4 * H)),
        "whh": w(ks[9], (H, 4 * H)),
        "bhh": w(ks[10], (1, 4 * H)),
        # out: Linear(H, V)
        "out_w": w(ks[11], (H, V)),
        "out_b": jnp.zeros((1, V), jnp.float32),
    }


def prepare_params(params, *, v_tile=2048):
    """One-time weight preparation, hoisted out of the per-step forward:
    bf16 weight casts, fused per-gate LSTM bias, and lane-aligned vocab padding of
    the output projection. Call once and reuse across all decode steps."""
    f32, bf16 = jnp.float32, jnp.bfloat16
    E, H = params["attn_w"].shape
    V = params["out_w"].shape[-1]
    tv = min(v_tile, _round_up(V, 128))
    V_pad = _round_up(V, tv)

    # padded bias = -1e30 so padded logits contribute exp(...) = 0 to the LSE (exact;
    # V_pad - V < tv guarantees every tile holds at least one real column).
    out_w = jnp.zeros((H, V_pad), bf16).at[:, :V].set(params["out_w"].astype(bf16))
    out_b = jnp.full((1, V_pad), -1e30, f32).at[:, :V].set(params["out_b"].astype(f32))
    # TODO(synk): int8 (v5e/v6e) or fp8-e4m3 (v7x) quantization of out_w with per-group
    # scales would roughly halve HBM traffic on the dominant vocab loop.

    return {
        "E": E, "H": H, "V": V, "V_pad": V_pad, "tv": tv, "nv": V_pad // tv,
        "attn_w": params["attn_w"].astype(bf16),
        "attn_b": params["attn_b"].astype(f32),
        "comb_wx": params["comb_wx"].astype(bf16),
        "comb_w1": params["comb_w1"].astype(bf16),
        "comb_b": params["comb_b"].astype(f32),
        "wih": params["wih"].astype(bf16),
        "whh": params["whh"].astype(bf16),
        "b4": (params["bih"] + params["bhh"]).astype(f32),   # (1, 4H) fused gate bias
        "out_w": out_w,
        "out_b": out_b,
    }


def prepare_encoder(encoder_outputs):
    """Per-sequence preparation, hoisted out of the per-step forward: encoder outputs
    flattened (T, H) plus the pre-transposed (H, T) for lane-dense attention scores."""
    T, H = encoder_outputs.shape[1], encoder_outputs.shape[2]
    enc = encoder_outputs.reshape(T, H).astype(jnp.float32)
    return enc, enc.T


# --------------------------------------------------------------------------- #
# Per-step forward (context_info=None branch of BaseType.forward)
# --------------------------------------------------------------------------- #
def base_type_step(pp, input_emb, hidden, enc_prepared):
    """One decode step.

    pp:            prepare_params(...) output
    input_emb:     (1, 1, E)  (already embedded, as in the PyTorch module)
    hidden:        (h0, c0), each (1, 1, H)
    enc_prepared:  prepare_encoder(encoder_outputs) output
    returns (log_probs (1, V), (h1, c1) each (1, 1, H))
    """
    f32, bf16 = jnp.float32, jnp.bfloat16
    E, H, V = pp["E"], pp["H"], pp["V"]
    V_pad, tv, nv = pp["V_pad"], pp["tv"], pp["nv"]
    enc, enc_t = enc_prepared

    x = input_emb.reshape(1, E).astype(f32)
    h0 = hidden[0].reshape(1, H).astype(f32)
    c0 = hidden[1].reshape(1, H).astype(f32)

    # ---- kernel 1: attention + LSTM cell (tiny, whole arrays resident in VMEM) ----
    # TODO(synk): in a tight decode loop h0/c0 could be donated in place via
    # input_output_aliases; omitted here to keep argument positions robust.
    vmem = pl.BlockSpec(memory_space=pltpu.MemorySpace.VMEM)
    h1, c1, h_bf = pl.pallas_call(
        prologue_kernel,
        out_shape=(
            jax.ShapeDtypeStruct((1, H), f32),
            jax.ShapeDtypeStruct((1, H), f32),
            jax.ShapeDtypeStruct((1, H), bf16),
        ),
        in_specs=[vmem] * 13,
        out_specs=(vmem, vmem, vmem),
    )(x, enc_t, enc, h0, c0,
      pp["attn_w"], pp["attn_b"],
      pp["comb_wx"], pp["comb_w1"], pp["comb_b"],
      pp["wih"], pp["whh"], pp["b4"])

    # ---- kernel 2: output projection over vocab tiles (parallel grid) ----
    tile_in = H * tv * 2 + tv * 4                 # out_w + out_b tiles (bytes)
    tile_out = tv * 4 + 2 * 128 * 4               # logits tile + partials tile
    vmem_bytes = 2 * (tile_in + tile_out) + 2 * H * 2
    vmem_limit = int(min(64 * 2 ** 20, max(32 * 2 ** 20, 2 * vmem_bytes)))

    logits, part = pl.pallas_call(
        vocab_kernel,
        out_shape=(
            jax.ShapeDtypeStruct((1, V_pad), f32),
            jax.ShapeDtypeStruct((2, nv * 128), f32),
        ),
        grid_spec=pltpu.PrefetchScalarGridSpec(
            num_scalar_prefetch=0,
            grid=(nv,),
            in_specs=[
                pl.BlockSpec((1, H), lambda j: (0, 0)),      # h (tiny, revisited block)
                pl.BlockSpec((H, tv), lambda j: (0, j)),     # out_w vocab tile (streamed)
                pl.BlockSpec((1, tv), lambda j: (0, j)),     # out_b vocab tile
            ],
            out_specs=(
                pl.BlockSpec((1, tv), lambda j: (0, j)),     # raw logits (padded)
                pl.BlockSpec((2, 128), lambda j: (0, j)),    # per-tile (max, sum-exp)
            ),
        ),
        compiler_params=pltpu.CompilerParams(
            dimension_semantics=("parallel",),               # no cross-tile state -> both v7x TCs
            vmem_limit_bytes=vmem_limit,
        ),
        cost_estimate=pl.CostEstimate(
            flops=2 * H * V_pad,
            transcendentals=V_pad,
            bytes_accessed=H * V_pad * 2 + 2 * V_pad * 4 + nv * 256 * 4 + H * 2,
        ),
    )(h_bf, pp["out_w"], pp["out_b"])

    # exact cross-tile log-sum-exp reduction over the tiny per-tile partials
    part = part.reshape(2, nv, 128)[:, :, 0]                 # (2, nv)
    m_j, s_j = part[0], part[1]
    m = jnp.max(m_j)
    lse = m + jnp.log(jnp.sum(s_j * jnp.exp(m_j - m)))
    logp = logits[:, :V] - lse                                # log_softmax = logits - lse

    return logp, (h1.reshape(1, 1, H), c1.reshape(1, 1, H))


def base_type_forward(params, input_emb, hidden, encoder_outputs, *, v_tile=2048):
    """One-shot convenience wrapper. In a decode loop, call prepare_params /
    prepare_encoder once and reuse them with base_type_step (see __main__)."""
    pp = prepare_params(params, v_tile=v_tile)
    return base_type_step(pp, input_emb, hidden, prepare_encoder(encoder_outputs))


# --------------------------------------------------------------------------- #
# Pure-JAX reference (matches the kernel's bf16 weight storage)
# --------------------------------------------------------------------------- #
def _reference(params, input_emb, hidden, encoder_outputs):
    f32, bf16 = jnp.float32, jnp.bfloat16
    E = input_emb.shape[-1]
    H = hidden[0].shape[-1]
    T = encoder_outputs.shape[1]
    hp = jax.lax.Precision.HIGHEST

    def bw(w):
        return w.astype(bf16).astype(f32)

    def bx(a):
        return a.astype(bf16).astype(f32)

    x = input_emb.reshape(1, E).astype(f32)
    enc = encoder_outputs.reshape(T, H).astype(f32)
    h0 = hidden[0].reshape(1, H).astype(f32)
    c0 = hidden[1].reshape(1, H).astype(f32)

    ti = bx(x) @ bw(params["attn_w"]) + params["attn_b"]
    scores = jnp.dot(ti, enc.T, precision=hp)
    p = jax.nn.softmax(scores, axis=1)
    ctx = jnp.dot(p, enc, precision=hp)
    comb = (bx(x) @ bw(params["comb_wx"]) + bx(ctx) @ bw(params["comb_w1"]) + params["comb_b"])
    a = jnp.tanh(comb)
    gates = (bx(a) @ bw(params["wih"]) + params["bih"]
             + bx(h0) @ bw(params["whh"]) + params["bhh"])
    i_g = jax.nn.sigmoid(gates[:, 0 * H:1 * H])
    f_g = jax.nn.sigmoid(gates[:, 1 * H:2 * H])
    g_g = jnp.tanh(gates[:, 2 * H:3 * H])
    o_g = jax.nn.sigmoid(gates[:, 3 * H:4 * H])
    c1 = f_g * c0 + i_g * g_g
    h1 = o_g * jnp.tanh(c1)
    logits = bx(h1) @ bw(params["out_w"]) + params["out_b"]
    return jax.nn.log_softmax(logits, axis=1), h1, c1


if __name__ == "__main__":
    V, E, H, T = 300, 32, 32, 8   # vocab_size, embed_size, hidden_size, encoder seq len

    key = jax.random.PRNGKey(0)
    kp, kx, ke, kh, kc, kx2 = jax.random.split(key, 6)

    params = init_params(kp, V, E, H)
    input_emb = jax.random.normal(kx, (1, 1, E), jnp.float32)       # B=1, already embedded
    encoder_outputs = jax.random.normal(ke, (1, T, H), jnp.float32)
    h0 = jax.random.normal(kh, (1, 1, H), jnp.float32)
    c0 = jax.random.normal(kc, (1, 1, H), jnp.float32)

    # One-time preparation (hoisted per the perf review): v_tile=128 pads V to 384 and
    # gives a 3-step parallel vocab grid, exercising the per-tile LSE partials.
    pp = prepare_params(params, v_tile=128)
    enc_prep = prepare_encoder(encoder_outputs)

    logp, (h1, c1) = base_type_step(pp, input_emb, (h0, c0), enc_prep)
    jax.block_until_ready((logp, h1, c1))

    assert logp.shape == (1, V) and h1.shape == (1, 1, H) and c1.shape == (1, 1, H)
    assert bool(jnp.all(jnp.isfinite(logp)))

    ref_logp, ref_h1, ref_c1 = _reference(params, input_emb, (h0, c0), encoder_outputs)
    assert jnp.allclose(logp, ref_logp, atol=1e-1, rtol=1e-2), "log-prob mismatch vs reference"
    assert jnp.allclose(h1.reshape(1, H), ref_h1, atol=5e-2, rtol=1e-2), "h mismatch vs reference"
    assert jnp.allclose(c1.reshape(1, H), ref_c1, atol=5e-2, rtol=1e-2), "c mismatch vs reference"

    # second decode step reusing the prepared weights / encoder, feeding state back
    input_emb2 = jax.random.normal(kx2, (1, 1, E), jnp.float32)
    logp2, (h2, c2) = base_type_step(pp, input_emb2, (h1, c1), enc_prep)
    jax.block_until_ready((logp2, h2, c2))
    assert bool(jnp.all(jnp.isfinite(logp2)))

    print("KERNEL_OK")
</pallas_src>

<mosaic_0001>
module attributes {stable_mosaic.version = 11 : i64} {
  func.func @prologue_kernel(%arg0: memref<1x32xf32, #tpu.memory_space<vmem>>, %arg1: memref<32x8xf32, #tpu.memory_space<vmem>>, %arg2: memref<8x32xf32, #tpu.memory_space<vmem>>, %arg3: memref<1x32xf32, #tpu.memory_space<vmem>>, %arg4: memref<1x32xf32, #tpu.memory_space<vmem>>, %arg5: memref<32x32xbf16, #tpu.memory_space<vmem>>, %arg6: memref<1x32xf32, #tpu.memory_space<vmem>>, %arg7: memref<32x32xbf16, #tpu.memory_space<vmem>>, %arg8: memref<32x32xbf16, #tpu.memory_space<vmem>>, %arg9: memref<1x32xf32, #tpu.memory_space<vmem>>, %arg10: memref<32x128xbf16, #tpu.memory_space<vmem>>, %arg11: memref<32x128xbf16, #tpu.memory_space<vmem>>, %arg12: memref<1x128xf32, #tpu.memory_space<vmem>>, %arg13: memref<1x32xf32, #tpu.memory_space<vmem>>, %arg14: memref<1x32xf32, #tpu.memory_space<vmem>>, %arg15: memref<1x32xbf16, #tpu.memory_space<vmem>>) attributes {dimension_semantics = [], scalar_prefetch = 0 : i64, scratch_operands = 0 : i64, tpu.core_type = #tpu.core_type<tc>} {
    %c0 = arith.constant 0 : index
    %c0_0 = arith.constant 0 : index
    %0 = vector.load %arg0[%c0, %c0_0] : memref<1x32xf32, #tpu.memory_space<vmem>>, vector<1x32xf32>
    %1 = arith.truncf %0 : vector<1x32xf32> to vector<1x32xbf16>
    %c0_1 = arith.constant 0 : index
    %c0_2 = arith.constant 0 : index
    %2 = vector.load %arg5[%c0_1, %c0_2] : memref<32x32xbf16, #tpu.memory_space<vmem>>, vector<32x32xbf16>
    %cst = arith.constant dense<0.000000e+00> : vector<1x32xf32>
    %3 = tpu.matmul %1, %2, %cst {dimension_numbers = #tpu.dot_dimension_numbers<[1], [0], [0], [1], [0, 0, 1, 1], [], []>} : vector<1x32xbf16>, vector<32x32xbf16>, vector<1x32xf32> -> vector<1x32xf32>
    %c0_3 = arith.constant 0 : index
    %c0_4 = arith.constant 0 : index
    %4 = vector.load %arg6[%c0_3, %c0_4] : memref<1x32xf32, #tpu.memory_space<vmem>>, vector<1x32xf32>
    %5 = arith.addf %3, %4 : vector<1x32xf32>
    %c0_5 = arith.constant 0 : index
    %c0_6 = arith.constant 0 : index
    %6 = vector.load %arg1[%c0_5, %c0_6] : memref<32x8xf32, #tpu.memory_space<vmem>>, vector<32x8xf32>
    %cst_7 = arith.constant dense<0.000000e+00> : vector<1x8xf32>
    %7 = tpu.matmul %5, %6, %cst_7 {dimension_numbers = #tpu.dot_dimension_numbers<[1], [0], [0], [1], [0, 0, 1, 1], [], []>} : vector<1x32xf32>, vector<32x8xf32>, vector<1x8xf32> -> vector<1x8xf32>
    %cst_8 = arith.constant dense<0xFF800000> : vector<1xf32>
    %8 = vector.multi_reduction <maximumf>, %7, %cst_8 [1] : vector<1x8xf32> to vector<1xf32>
    %9 = vector.shape_cast %8 : vector<1xf32> to vector<1x1xf32>
    %10 = vector.broadcast %9 : vector<1x1xf32> to vector<1x8xf32>
    %11 = arith.subf %7, %10 : vector<1x8xf32>
    %12 = math.exp %11 : vector<1x8xf32>
    %cst_9 = arith.constant dense<0.000000e+00> : vector<1xf32>
    %13 = vector.multi_reduction <add>, %12, %cst_9 [1] : vector<1x8xf32> to vector<1xf32>
    %14 = vector.shape_cast %13 : vector<1xf32> to vector<1x1xf32>
    %15 = vector.broadcast %14 : vector<1x1xf32> to vector<1x8xf32>
    %16 = arith.divf %12, %15 : vector<1x8xf32>
    %c0_10 = arith.constant 0 : index
    %c0_11 = arith.constant 0 : index
    %17 = vector.load %arg2[%c0_10, %c0_11] : memref<8x32xf32, #tpu.memory_space<vmem>>, vector<8x32xf32>
    %cst_12 = arith.constant dense<0.000000e+00> : vector<1x32xf32>
    %18 = tpu.matmul %16, %17, %cst_12 {dimension_numbers = #tpu.dot_dimension_numbers<[1], [0], [0], [1], [0, 0, 1, 1], [], []>} : vector<1x8xf32>, vector<8x32xf32>, vector<1x32xf32> -> vector<1x32xf32>
    %c0_13 = arith.constant 0 : index
    %c0_14 = arith.constant 0 : index
    %19 = vector.load %arg7[%c0_13, %c0_14] : memref<32x32xbf16, #tpu.memory_space<vmem>>, vector<32x32xbf16>
    %cst_15 = arith.constant dense<0.000000e+00> : vector<1x32xf32>
    %20 = tpu.matmul %1, %19, %cst_15 {dimension_numbers = #tpu.dot_dimension_numbers<[1], [0], [0], [1], [0, 0, 1, 1], [], []>} : vector<1x32xbf16>, vector<32x32xbf16>, vector<1x32xf32> -> vector<1x32xf32>
    %21 = arith.truncf %18 : vector<1x32xf32> to vector<1x32xbf16>
    %c0_16 = arith.constant 0 : index
    %c0_17 = arith.constant 0 : index
    %22 = vector.load %arg8[%c0_16, %c0_17] : memref<32x32xbf16, #tpu.memory_space<vmem>>, vector<32x32xbf16>
    %cst_18 = arith.constant dense<0.000000e+00> : vector<1x32xf32>
    %23 = tpu.matmul %21, %22, %cst_18 {dimension_numbers = #tpu.dot_dimension_numbers<[1], [0], [0], [1], [0, 0, 1, 1], [], []>} : vector<1x32xbf16>, vector<32x32xbf16>, vector<1x32xf32> -> vector<1x32xf32>
    %24 = arith.addf %20, %23 : vector<1x32xf32>
    %c0_19 = arith.constant 0 : index
    %c0_20 = arith.constant 0 : index
    %25 = vector.load %arg9[%c0_19, %c0_20] : memref<1x32xf32, #tpu.memory_space<vmem>>, vector<1x32xf32>
    %26 = arith.addf %24, %25 : vector<1x32xf32>
    %27 = math.tanh %26 : vector<1x32xf32>
    %28 = arith.truncf %27 : vector<1x32xf32> to vector<1x32xbf16>
    %c0_21 = arith.constant 0 : index
    %c0_22 = arith.constant 0 : index
    %29 = vector.load %arg3[%c0_21, %c0_22] : memref<1x32xf32, #tpu.memory_space<vmem>>, vector<1x32xf32>
    %30 = arith.truncf %29 : vector<1x32xf32> to vector<1x32xbf16>
    %c0_23 = arith.constant 0 : index
    %c0_24 = arith.constant 0 : index
    %31 = vector.load %arg10[%c0_23, %c0_24] : memref<32x128xbf16, #tpu.memory_space<vmem>>, vector<32x128xbf16>
    %cst_25 = arith.constant dense<0.000000e+00> : vector<1x128xf32>
    %32 = tpu.matmul %28, %31, %cst_25 {dimension_numbers = #tpu.dot_dimension_numbers<[1], [0], [0], [1], [0, 0, 1, 1], [], []>} : vector<1x32xbf16>, vector<32x128xbf16>, vector<1x128xf32> -> vector<1x128xf32>
    %c0_26 = arith.constant 0 : index
    %c0_27 = arith.constant 0 : index
    %33 = vector.load %arg11[%c0_26, %c0_27] : memref<32x128xbf16, #tpu.memory_space<vmem>>, vector<32x128xbf16>
    %cst_28 = arith.constant dense<0.000000e+00> : vector<1x128xf32>
    %34 = tpu.matmul %30, %33, %cst_28 {dimension_numbers = #tpu.dot_dimension_numbers<[1], [0], [0], [1], [0, 0, 1, 1], [], []>} : vector<1x32xbf16>, vector<32x128xbf16>, vector<1x128xf32> -> vector<1x128xf32>
    %35 = arith.addf %32, %34 : vector<1x128xf32>
    %c0_29 = arith.constant 0 : index
    %c0_30 = arith.constant 0 : index
    %36 = vector.load %arg12[%c0_29, %c0_30] : memref<1x128xf32, #tpu.memory_space<vmem>>, vector<1x128xf32>
    %37 = arith.addf %35, %36 : vector<1x128xf32>
    %38 = vector.extract_strided_slice %37 {offsets = [0, 0], sizes = [1, 32], strides = [1, 1]} : vector<1x128xf32> to vector<1x32xf32>
    %cst_31 = arith.constant 5.000000e-01 : f32
    %39 = vector.broadcast %cst_31 : f32 to vector<1x32xf32>
    %40 = arith.mulf %39, %38 : vector<1x32xf32>
    %41 = math.tanh %40 : vector<1x32xf32>
    %cst_32 = arith.constant 1.000000e+00 : f32
    %42 = vector.broadcast %cst_32 : f32 to vector<1x32xf32>
    %43 = arith.addf %41, %42 : vector<1x32xf32>
    %cst_33 = arith.constant 5.000000e-01 : f32
    %44 = vector.broadcast %cst_33 : f32 to vector<1x32xf32>
    %45 = arith.mulf %44, %43 : vector<1x32xf32>
    %46 = vector.extract_strided_slice %37 {offsets = [0, 32], sizes = [1, 32], strides = [1, 1]} : vector<1x128xf32> to vector<1x32xf32>
    %cst_34 = arith.constant 5.000000e-01 : f32
    %47 = vector.broadcast %cst_34 : f32 to vector<1x32xf32>
    %48 = arith.mulf %47, %46 : vector<1x32xf32>
    %49 = math.tanh %48 : vector<1x32xf32>
    %cst_35 = arith.constant 1.000000e+00 : f32
    %50 = vector.broadcast %cst_35 : f32 to vector<1x32xf32>
    %51 = arith.addf %49, %50 : vector<1x32xf32>
    %cst_36 = arith.constant 5.000000e-01 : f32
    %52 = vector.broadcast %cst_36 : f32 to vector<1x32xf32>
    %53 = arith.mulf %52, %51 : vector<1x32xf32>
    %54 = vector.extract_strided_slice %37 {offsets = [0, 64], sizes = [1, 32], strides = [1, 1]} : vector<1x128xf32> to vector<1x32xf32>
    %55 = math.tanh %54 : vector<1x32xf32>
    %56 = vector.extract_strided_slice %37 {offsets = [0, 96], sizes = [1, 32], strides = [1, 1]} : vector<1x128xf32> to vector<1x32xf32>
    %cst_37 = arith.constant 5.000000e-01 : f32
    %57 = vector.broadcast %cst_37 : f32 to vector<1x32xf32>
    %58 = arith.mulf %57, %56 : vector<1x32xf32>
    %59 = math.tanh %58 : vector<1x32xf32>
    %cst_38 = arith.constant 1.000000e+00 : f32
    %60 = vector.broadcast %cst_38 : f32 to vector<1x32xf32>
    %61 = arith.addf %59, %60 : vector<1x32xf32>
    %cst_39 = arith.constant 5.000000e-01 : f32
    %62 = vector.broadcast %cst_39 : f32 to vector<1x32xf32>
    %63 = arith.mulf %62, %61 : vector<1x32xf32>
    %c0_40 = arith.constant 0 : index
    %c0_41 = arith.constant 0 : index
    %64 = vector.load %arg4[%c0_40, %c0_41] : memref<1x32xf32, #tpu.memory_space<vmem>>, vector<1x32xf32>
    %65 = arith.mulf %53, %64 : vector<1x32xf32>
    %66 = arith.mulf %45, %55 : vector<1x32xf32>
    %67 = arith.addf %65, %66 : vector<1x32xf32>
    %68 = math.tanh %67 : vector<1x32xf32>
    %69 = arith.mulf %63, %68 : vector<1x32xf32>
    %c0_42 = arith.constant 0 : index
    %c0_43 = arith.constant 0 : index
    %70 = vector.load %arg13[%c0_42, %c0_43] : memref<1x32xf32, #tpu.memory_space<vmem>>, vector<1x32xf32>
    tpu.vector_store %arg13[%c0_42, %c0_43], %69 {strides = array<i32>} : memref<1x32xf32, #tpu.memory_space<vmem>>, vector<1x32xf32>,
    %c0_44 = arith.constant 0 : index
    %c0_45 = arith.constant 0 : index
    %71 = vector.load %arg14[%c0_44, %c0_45] : memref<1x32xf32, #tpu.memory_space<vmem>>, vector<1x32xf32>
    tpu.vector_store %arg14[%c0_44, %c0_45], %67 {strides = array<i32>} : memref<1x32xf32, #tpu.memory_space<vmem>>, vector<1x32xf32>,
    %72 = arith.truncf %69 : vector<1x32xf32> to vector<1x32xbf16>
    %c0_46 = arith.constant 0 : index
    %c0_47 = arith.constant 0 : index
    %73 = vector.load %arg15[%c0_46, %c0_47] : memref<1x32xbf16, #tpu.memory_space<vmem>>, vector<1x32xbf16>
    tpu.vector_store %arg15[%c0_46, %c0_47], %72 {strides = array<i32>} : memref<1x32xbf16, #tpu.memory_space<vmem>>, vector<1x32xbf16>,
    return
  }
}

</mosaic_0001>

<llo_original>
// kernel: tpu_custom_call.1
$region0: #{tpu_custom_call.1}
  #allocation0 [shape = 'u32[]', space=smem, size = 0x4, offset = 0x4, fixed_abs, tag = 'smem constant byte address 0x4 - core index']
  #allocation1 [shape = 'u32[144,128]{1,0:T(1,128)}', space=vmem, size = 0x12000, scoped, tag = 'internal scratch']
  %s0 = inlined_call_operand.vmem [shape: f32[1,32], index: 0, kind: input, shape index: {}]
  %s1 = inlined_call_operand.vmem [shape: f32[32,8], index: 1, kind: input, shape index: {}]
  %s2 = inlined_call_operand.hbm [shape: f32[8,32], index: 2, kind: input, shape index: {}]
  %s3 = inlined_call_operand.hbm [shape: f32[1,32], index: 3, kind: input, shape index: {}]
  %s4 = inlined_call_operand.hbm [shape: f32[1,32], index: 4, kind: input, shape index: {}]
  %s5 = inlined_call_operand.vmem [shape: bf16[32,32], index: 5, kind: input, shape index: {}]
  %s6 = inlined_call_operand.hbm [shape: f32[1,32], index: 6, kind: input, shape index: {}]
  %s7 = inlined_call_operand.vmem [shape: bf16[32,32], index: 7, kind: input, shape index: {}]
  %s8 = inlined_call_operand.vmem [shape: bf16[32,32], index: 8, kind: input, shape index: {}]
  %s9 = inlined_call_operand.hbm [shape: f32[1,32], index: 9, kind: input, shape index: {}]
  %s10 = inlined_call_operand.vmem [shape: bf16[32,128], index: 10, kind: input, shape index: {}]
  %s11 = inlined_call_operand.vmem [shape: bf16[32,128], index: 11, kind: input, shape index: {}]
  %s12 = inlined_call_operand.vmem [shape: f32[1,128], index: 12, kind: input, shape index: {}]
  %s13 = inlined_call_operand.hbm [shape: f32[1,32], index: 13, kind: output, shape index: {0}]
  %s14 = inlined_call_operand.hbm [shape: f32[1,32], index: 14, kind: output, shape index: {1}]
  %s15 = inlined_call_operand.hbm [shape: bf16[1,32], index: 15, kind: output, shape index: {2}]
  %16 = xla_tuple %s13, %s14, %s15
  %s17 = sld [smem:[#allocation0]]
  $region98: #{tpu_custom_call.1} parent=0
    _
  %s19 = ssub.s32 1, %s17
  %s20 = scalar_select 0, %s19, %s17
  $region1: #{tpu_custom_call.1} parent=0
    #allocation2 [shape = 'u8[4096]{0}', space=vmem, size = 0x1000, scoped, tag = 'input window, operand 2, single buffered']
    #allocation3 [shape = 's32[1]{0}', space=sflag, size = 0x4, scoped, tag = 'scoped memory for tpu_custom_call.1']
    #allocation4 [shape = 's32[1]{0}', space=sflag, size = 0x4, scoped, tag = 'scoped memory for tpu_custom_call.1']
    #allocation5 [shape = 'u8[512]{0}', space=vmem, size = 0x400, scoped, tag = 'input window, operand 3, single buffered']
    #allocation6 [shape = 's32[1]{0}', space=sflag, size = 0x4, scoped, tag = 'scoped memory for tpu_custom_call.1']
    #allocation7 [shape = 'u8[512]{0}', space=vmem, size = 0x400, scoped, tag = 'input window, operand 4, single buffered']
    #allocation8 [shape = 'u8[512]{0}', space=vmem, size = 0x400, scoped, tag = 'input window, operand 6, single buffered']
    #allocation9 [shape = 's32[1]{0}', space=sflag, size = 0x4, scoped, tag = 'scoped memory for tpu_custom_call.1']
    #allocation10 [shape = 'u8[512]{0}', space=vmem, size = 0x400, scoped, tag = 'input window, operand 9, single buffered']
    #allocation11 [shape = 'u8[512]{0}', space=vmem, size = 0x400, scoped, tag = 'output window, operand 0, single buffered']
    #allocation12 [shape = 'u8[512]{0}', space=vmem, size = 0x400, scoped, tag = 'output window, operand 1, single buffered']
    #allocation13 [shape = 's32[1]{0}', space=sflag, size = 0x4, scoped, tag = 'scoped memory for tpu_custom_call.1']
    #allocation14 [shape = 'u8[512]{0}', space=vmem, size = 0x400, scoped, tag = 'output window, operand 2, single buffered']
    %21 = vsyncpa [#allocation3], 0
    %22 = vsyncpa [#allocation6], 0
    %23 = vsyncpa [#allocation9], 0
    %24 = vsyncpa [#allocation4], 0
    %25 = vsyncpa [#allocation13], 0
    // Predicated region
    $region2: #{tpu_custom_call.1} parent=1 // pred_check
      _
    $region3: #{tpu_custom_call.1} parent=1 // pred_check_branch
      %27 = sbr.rel (0) target = $region5
    $region4: #{tpu_custom_call.1} parent=1 // pred_region
      _
    $region5: #{tpu_custom_call.1} parent=1 // pred_fallthru
      _
    // Predicated region
    $region6: #{tpu_custom_call.1} parent=1 // pred_check
      _
    $region7: #{tpu_custom_call.1} parent=1 // pred_check_branch
      %29 = sbr.rel (0) target = $region9
    $region8: #{tpu_custom_call.1} parent=1 // pred_region
      _
    $region9: #{tpu_custom_call.1} parent=1 // pred_fallthru
      _
    // Predicated region
    $region10: #{tpu_custom_call.1} parent=1 // pred_check
      _
    $region11: #{tpu_custom_call.1} parent=1 // pred_check_branch
      %31 = sbr.rel (0) target = $region13
    $region12: #{tpu_custom_call.1} parent=1 // pred_region
      %s33 = ssub.s32 128, 128
      %34 = vsyncadd [#allocation3], %s33
      %s36 = sshll.u32 [#allocation2], 4
      %s37 = int_to_ptr.vmem [resolvable:$true] %s36
      %39 = dma.hbm_to_vmem [thread:$0]  %s2, 128, %s37, [#allocation3]
    $region13: #{tpu_custom_call.1} parent=1 // pred_fallthru
      _
    // Predicated region
    $region14: #{tpu_custom_call.1} parent=1 // pred_check
      _
    $region15: #{tpu_custom_call.1} parent=1 // pred_check_branch
      %41 = sbr.rel (0) target = $region17
    $region16: #{tpu_custom_call.1} parent=1 // pred_region
      %s43 = ssub.s32 16, 16
      %44 = vsyncadd [#allocation6], %s43
      %s46 = sshll.u32 [#allocation5], 4
      %s47 = int_to_ptr.vmem [resolvable:$true] %s46
      %49 = dma.hbm_to_vmem [thread:$0]  %s3, 16, %s47, [#allocation6]
    $region17: #{tpu_custom_call.1} parent=1 // pred_fallthru
      _
    // Predicated region
    $region18: #{tpu_custom_call.1} parent=1 // pred_check
      _
    $region19: #{tpu_custom_call.1} parent=1 // pred_check_branch
      %51 = sbr.rel (0) target = $region21
    $region20: #{tpu_custom_call.1} parent=1 // pred_region
      %s53 = ssub.s32 16, 16
      %54 = vsyncadd [#allocation6], %s53
      %s56 = sshll.u32 [#allocation7], 4
      %s57 = int_to_ptr.vmem [resolvable:$true] %s56
      %59 = dma.hbm_to_vmem [thread:$0]  %s4, 16, %s57, [#allocation6]
    $region21: #{tpu_custom_call.1} parent=1 // pred_fallthru
      _
    // Predicated region
    $region22: #{tpu_custom_call.1} parent=1 // pred_check
      _
    $region23: #{tpu_custom_call.1} parent=1 // pred_check_branch
      %61 = sbr.rel (0) target = $region25
    $region24: #{tpu_custom_call.1} parent=1 // pred_region
      _
    $region25: #{tpu_custom_call.1} parent=1 // pred_fallthru
      _
    // Predicated region
    $region26: #{tpu_custom_call.1} parent=1 // pred_check
      _
    $region27: #{tpu_custom_call.1} parent=1 // pred_check_branch
      %63 = sbr.rel (0) target = $region29
    $region28: #{tpu_custom_call.1} parent=1 // pred_region
      %s65 = ssub.s32 16, 16
      %66 = vsyncadd [#allocation9], %s65
      %s68 = sshll.u32 [#allocation8], 4
      %s69 = int_to_ptr.vmem [resolvable:$true] %s68
      %71 = dma.hbm_to_vmem [thread:$0]  %s6, 16, %s69, [#allocation9]
    $region29: #{tpu_custom_call.1} parent=1 // pred_fallthru
      _
    // Predicated region
    $region30: #{tpu_custom_call.1} parent=1 // pred_check
      _
    $region31: #{tpu_custom_call.1} parent=1 // pred_check_branch
      %73 = sbr.rel (0) target = $region33
    $region32: #{tpu_custom_call.1} parent=1 // pred_region
      _
    $region33: #{tpu_custom_call.1} parent=1 // pred_fallthru
      _
    // Predicated region
    $region34: #{tpu_custom_call.1} parent=1 // pred_check
      _
    $region35: #{tpu_custom_call.1} parent=1 // pred_check_branch
      %75 = sbr.rel (0) target = $region37
    $region36: #{tpu_custom_call.1} parent=1 // pred_region
      _
    $region37: #{tpu_custom_call.1} parent=1 // pred_fallthru
      _
    // Predicated region
    $region38: #{tpu_custom_call.1} parent=1 // pred_check
      _
    $region39: #{tpu_custom_call.1} parent=1 // pred_check_branch
      %77 = sbr.rel (0) target = $region41
    $region40: #{tpu_custom_call.1} parent=1 // pred_region
      %s79 = ssub.s32 16, 16
      %80 = vsyncadd [#allocation9], %s79
      %s82 = sshll.u32 [#allocation10], 4
      %s83 = int_to_ptr.vmem [resolvable:$true] %s82
      %85 = dma.hbm_to_vmem [thread:$0]  %s9, 16, %s83, [#allocation9]
    $region41: #{tpu_custom_call.1} parent=1 // pred_fallthru
      _
    // Predicated region
    $region42: #{tpu_custom_call.1} parent=1 // pred_check
      _
    $region43: #{tpu_custom_call.1} parent=1 // pred_check_branch
      %87 = sbr.rel (0) target = $region45
    $region44: #{tpu_custom_call.1} parent=1 // pred_region
      _
    $region45: #{tpu_custom_call.1} parent=1 // pred_fallthru
      _
    // Predicated region
    $region46: #{tpu_custom_call.1} parent=1 // pred_check
      _
    $region47: #{tpu_custom_call.1} parent=1 // pred_check_branch
      %89 = sbr.rel (0) target = $region49
    $region48: #{tpu_custom_call.1} parent=1 // pred_region
      _
    $region49: #{tpu_custom_call.1} parent=1 // pred_fallthru
      _
    // Predicated region
    $region50: #{tpu_custom_call.1} parent=1 // pred_check
      _
    $region51: #{tpu_custom_call.1} parent=1 // pred_check_branch
      %91 = sbr.rel (0) target = $region53
    $region52: #{tpu_custom_call.1} parent=1 // pred_region
      _
    $region53: #{tpu_custom_call.1} parent=1 // pred_fallthru
      _
    // Predicated region
    $region54: #{tpu_custom_call.1} parent=1 // pred_check
      _
    $region55: #{tpu_custom_call.1} parent=1 // pred_check_branch
      %93 = sbr.rel (0) target = $region57
    $region56: #{tpu_custom_call.1} parent=1 // pred_region
      %94 = dma.done [#allocation3], 128
    $region57: #{tpu_custom_call.1} parent=1 // pred_fallthru
      _
    // Predicated region
    $region58: #{tpu_custom_call.1} parent=1 // pred_check
      _
    $region59: #{tpu_custom_call.1} parent=1 // pred_check_branch
      %96 = sbr.rel (0) target = $region61
    $region60: #{tpu_custom_call.1} parent=1 // pred_region
      %97 = dma.done [#allocation6], 16
    $region61: #{tpu_custom_call.1} parent=1 // pred_fallthru
      _
    // Predicated region
    $region62: #{tpu_custom_call.1} parent=1 // pred_check
      _
    $region63: #{tpu_custom_call.1} parent=1 // pred_check_branch
      %99 = sbr.rel (0) target = $region65
    $region64: #{tpu_custom_call.1} parent=1 // pred_region
      %100 = dma.done [#allocation6], 16
    $region65: #{tpu_custom_call.1} parent=1 // pred_fallthru
      _
    // Predicated region
    $region66: #{tpu_custom_call.1} parent=1 // pred_check
      _
    $region67: #{tpu_custom_call.1} parent=1 // pred_check_branch
      %102 = sbr.rel (0) target = $region69
    $region68: #{tpu_custom_call.1} parent=1 // pred_region
      %103 = dma.done [#allocation9], 16
    $region69: #{tpu_custom_call.1} parent=1 // pred_fallthru
      _
    // Predicated region
    $region70: #{tpu_custom_call.1} parent=1 // pred_check
      _
    $region71: #{tpu_custom_call.1} parent=1 // pred_check_branch
      %105 = sbr.rel (0) target = $region73
    $region72: #{tpu_custom_call.1} parent=1 // pred_region
      %106 = dma.done [#allocation9], 16
    $region73: #{tpu_custom_call.1} parent=1 // pred_fallthru
      _
    %v108 = vld [vmem:[%s0] sm:$0x1]
    %v109 = vpack.c.bf16 %v108, %v108
    %v110 = vld [vmem:[%s5] sm:$0xf]
    %v111 = vld [vmem:[%s5 + $0x4] sm:$0xf]
    %v112 = vld [vmem:[%s5 + $0x8] sm:$0xf]
    %v113 = vld [vmem:[%s5 + $0xc] sm:$0xf]
    %v114 = vld [vmem:[#allocation8] sm:$0x1]
    %v119 = vunpack.c.l.b16 %v110
    %v120 = vunpack.c.l.b16 %v111
    %v121 = vunpack.c.l.b16 %v112
    %v122 = vunpack.c.l.b16 %v113
    %v123 = vpack.c.b16 %v120, %v119
    %v124 = vpack.c.b16 %v122, %v121
    %vm127 = vcmask 261120
    %v129 = vsel %vm127, %v109, 0
    %131 = vmatprep.subr.bf16.mxu0 0
    %132 = vmatpush1.bf16.msra.mxu0 %v123
    %133 = vmatprep.subr.bf16.mxu0 0
    %134 = vmatpush1.bf16.msra.mxu0 %v124
    %135 = vmatprep.subr.bf16.mxu0 0
    %136 = vmatpush1.bf16.msra.mxu0 0
    %137 = vmatprep.subr.bf16.mxu0 0
    %138 = vmatpush1.bf16.msra.mxu0 0
    %139 = vmatprep.subr.bf16.mxu0 0
    %140 = vmatpush1.bf16.msra.mxu0 0
    %141 = vmatprep.subr.bf16.mxu0 0
    %142 = vmatpush1.bf16.msra.mxu0 0
    %143 = vmatprep.subr.bf16.mxu0 0
    %144 = vmatpush1.bf16.msra.mxu0 0
    %145 = vmatprep.subr.bf16.mxu0 0
    %146 = vmatpush1.bf16.msra.mxu0 0
    %147 = vmatprep.subr.bf16.mxu0 0
    %148 = vmatpush1.bf16.msra.mxu0 0
    %149 = vmatprep.subr.bf16.mxu0 0
    %150 = vmatpush1.bf16.msra.mxu0 0
    %151 = vmatprep.subr.bf16.mxu0 0
    %152 = vmatpush1.bf16.msra.mxu0 0
    %153 = vmatprep.subr.bf16.mxu0 0
    %154 = vmatpush1.bf16.msra.mxu0 0
    %155 = vmatprep.subr.bf16.mxu0 0
    %156 = vmatpush1.bf16.msra.mxu0 0
    %157 = vmatprep.subr.bf16.mxu0 0
    %158 = vmatpush1.bf16.msra.mxu0 0
    %159 = vmatprep.subr.bf16.mxu0 0
    %160 = vmatpush1.bf16.msra.mxu0 0
    %161 = vmatprep.subr.bf16.mxu0 0
    %162 = vmatpush1.bf16.msra.mxu0 0
    %163 = vmatprep.mubr.bf16.mxu0 0
    %164 = vmatmul.mubr.bf16.gmra.mrb[0].mxu0 %v129
    %v165 = vpop.f32.mrb[0].mxu0
    %v166 = vadd.f32 %v114, %v165
    %v167 = vpop.f32.mrb[0].mxu0
    %v168 = vpop.f32.mrb[0].mxu0
    %v169 = vpop.f32.mrb[0].mxu0
    %170 = vdwg.mxu0
    %v171 = vld [vmem:[%s1] sm:$0xff]
    %v172 = vld [vmem:[%s1 + $0x8] sm:$0xff]
    %v173 = vld [vmem:[%s1 + $0x10] sm:$0xff]
    %v174 = vld [vmem:[%s1 + $0x18] sm:$0xff]
    %v176 = vsel %vm127, %v166, 0
    %178 = vmatprep.subr.mxu0 0.0
    %179 = vmatpush1.msra.mxu0 %v171
    %180 = vmatprep.subr.mxu0 0.0
    %181 = vmatpush1.msra.mxu0 %v172
    %182 = vmatprep.subr.mxu0 0.0
    %183 = vmatpush1.msra.mxu0 %v173
    %184 = vmatprep.subr.mxu0 0.0
    %185 = vmatpush1.msra.mxu0 %v174
    %186 = vmatprep.subr.mxu0 0.0
    %187 = vmatpush1.msra.mxu0 0.0
    %188 = vmatprep.subr.mxu0 0.0
    %189 = vmatpush1.msra.mxu0 0.0
    %190 = vmatprep.subr.mxu0 0.0
    %191 = vmatpush1.msra.mxu0 0.0
    %192 = vmatprep.subr.mxu0 0.0
    %193 = vmatpush1.msra.mxu0 0.0
    %194 = vmatprep.subr.mxu0 0.0
    %195 = vmatpush1.msra.mxu0 0.0
    %196 = vmatprep.subr.mxu0 0.0
    %197 = vmatpush1.msra.mxu0 0.0
    %198 = vmatprep.subr.mxu0 0.0
    %199 = vmatpush1.msra.mxu0 0.0
    %200 = vmatprep.subr.mxu0 0.0
    %201 = vmatpush1.msra.mxu0 0.0
    %202 = vmatprep.subr.mxu0 0.0
    %203 = vmatpush1.msra.mxu0 0.0
    %204 = vmatprep.subr.mxu0 0.0
    %205 = vmatpush1.msra.mxu0 0.0
    %206 = vmatprep.subr.mxu0 0.0
    %207 = vmatpush1.msra.mxu0 0.0
    %208 = vmatprep.subr.mxu0 0.0
    %209 = vmatpush1.msra.mxu0 0.0
    %210 = vmatprep.subr.mxu0 0.0
    %211 = vmatpush1.msra.mxu0 0.0
    %212 = vmatprep.subr.mxu0 0.0
    %213 = vmatpush1.msra.mxu0 0.0
    %214 = vmatprep.subr.mxu0 0.0
    %215 = vmatpush1.msra.mxu0 0.0
    %216 = vmatprep.subr.mxu0 0.0
    %217 = vmatpush1.msra.mxu0 0.0
    %218 = vmatprep.subr.mxu0 0.0
    %219 = vmatpush1.msra.mxu0 0.0
    %220 = vmatprep.subr.mxu0 0.0
    %221 = vmatpush1.msra.mxu0 0.0
    %222 = vmatprep.subr.mxu0 0.0
    %223 = vmatpush1.msra.mxu0 0.0
    %224 = vmatprep.subr.mxu0 0.0
    %225 = vmatpush1.msra.mxu0 0.0
    %226 = vmatprep.subr.mxu0 0.0
    %227 = vmatpush1.msra.mxu0 0.0
    %228 = vmatprep.subr.mxu0 0.0
    %229 = vmatpush1.msra.mxu0 0.0
    %230 = vmatprep.subr.mxu0 0.0
    %231 = vmatpush1.msra.mxu0 0.0
    %232 = vmatprep.subr.mxu0 0.0
    %233 = vmatpush1.msra.mxu0 0.0
    %234 = vmatprep.subr.mxu0 0.0
    %235 = vmatpush1.msra.mxu0 0.0
    %236 = vmatprep.subr.mxu0 0.0
    %237 = vmatpush1.msra.mxu0 0.0
    %238 = vmatprep.subr.mxu0 0.0
    %239 = vmatpush1.msra.mxu0 0.0
    %240 = vmatprep.subr.mxu0 0.0
    %241 = vmatpush1.msra.mxu0 0.0
    %242 = vmatprep.mubr.f32.mxu0 0.0
    %243 = vmatmul.mubr.f32.gmra.mrb[0].mxu0 %v176
    %v244 = vpop.f32.mrb[0].mxu0
    %v245 = vadd.f32 0.0, %v244
    %v246 = vpop.f32.mrb[0].mxu0
    %247 = vdwg.mxu0
    %vm248 = vcmask 57344
    %v249 = vsel %vm248, %v245, -inf
    %250 = vmax.xlane.f32.xlu0 %v249
    %v251 = vpop.xlane.xlu0 %250
    %v252 = vsub.f32 %v245, %v251
    %v253 = vmul.f32 %v252, 1.442695
    %v254 = vpow.pop %v253
    %v255 = vsel %vm248, %v254, 0.0
    %256 = vadd.xlane.f32.xlu0 %v255
    %v257 = vpop.xlane.xlu0 %256
    %v258 = vrcp.pop %v257
    %v259 = vmul.f32 %v254, %v258
    %v260 = vld [vmem:[#allocation2] sm:$0xff]
    %vm261 = vcmask 64512
    %v263 = vsel %vm261, %v259, 0
    %265 = vmatprep.subr.mxu0 0.0
    %266 = vmatpush1.msra.mxu0 %v260
    %267 = vmatprep.subr.mxu0 0.0
    %268 = vmatpush1.msra.mxu0 0.0
    %269 = vmatprep.subr.mxu0 0.0
    %270 = vmatpush1.msra.mxu0 0.0
    %271 = vmatprep.subr.mxu0 0.0
    %272 = vmatpush1.msra.mxu0 0.0
    %273 = vmatprep.subr.mxu0 0.0
    %274 = vmatpush1.msra.mxu0 0.0
    %275 = vmatprep.subr.mxu0 0.0
    %276 = vmatpush1.msra.mxu0 0.0
    %277 = vmatprep.subr.mxu0 0.0
    %278 = vmatpush1.msra.mxu0 0.0
    %279 = vmatprep.subr.mxu0 0.0
    %280 = vmatpush1.msra.mxu0 0.0
    %281 = vmatprep.subr.mxu0 0.0
    %282 = vmatpush1.msra.mxu0 0.0
    %283 = vmatprep.subr.mxu0 0.0
    %284 = vmatpush1.msra.mxu0 0.0
    %285 = vmatprep.subr.mxu0 0.0
    %286 = vmatpush1.msra.mxu0 0.0
    %287 = vmatprep.subr.mxu0 0.0
    %288 = vmatpush1.msra.mxu0 0.0
    %289 = vmatprep.subr.mxu0 0.0
    %290 = vmatpush1.msra.mxu0 0.0
    %291 = vmatprep.subr.mxu0 0.0
    %292 = vmatpush1.msra.mxu0 0.0
    %293 = vmatprep.subr.mxu0 0.0
    %294 = vmatpush1.msra.mxu0 0.0
    %295 = vmatprep.subr.mxu0 0.0
    %296 = vmatpush1.msra.mxu0 0.0
    %297 = vmatprep.subr.mxu0 0.0
    %298 = vmatpush1.msra.mxu0 0.0
    %299 = vmatprep.subr.mxu0 0.0
    %300 = vmatpush1.msra.mxu0 0.0
    %301 = vmatprep.subr.mxu0 0.0
    %302 = vmatpush1.msra.mxu0 0.0
    %303 = vmatprep.subr.mxu0 0.0
    %304 = vmatpush1.msra.mxu0 0.0
    %305 = vmatprep.subr.mxu0 0.0
    %306 = vmatpush1.msra.mxu0 0.0
    %307 = vmatprep.subr.mxu0 0.0
    %308 = vmatpush1.msra.mxu0 0.0
    %309 = vmatprep.subr.mxu0 0.0
    %310 = vmatpush1.msra.mxu0 0.0
    %311 = vmatprep.subr.mxu0 0.0
    %312 = vmatpush1.msra.mxu0 0.0
    %313 = vmatprep.subr.mxu0 0.0
    %314 = vmatpush1.msra.mxu0 0.0
    %315 = vmatprep.subr.mxu0 0.0
    %316 = vmatpush1.msra.mxu0 0.0
    %317 = vmatprep.subr.mxu0 0.0
    %318 = vmatpush1.msra.mxu0 0.0
    %319 = vmatprep.subr.mxu0 0.0
    %320 = vmatpush1.msra.mxu0 0.0
    %321 = vmatprep.subr.mxu0 0.0
    %322 = vmatpush1.msra.mxu0 0.0
    %323 = vmatprep.subr.mxu0 0.0
    %324 = vmatpush1.msra.mxu0 0.0
    %325 = vmatprep.subr.mxu0 0.0
    %326 = vmatpush1.msra.mxu0 0.0
    %327 = vmatprep.subr.mxu0 0.0
    %328 = vmatpush1.msra.mxu0 0.0
    %329 = vmatprep.mubr.f32.mxu0 0.0
    %330 = vmatmul.mubr.f32.gmra.mrb[0].mxu0 %v263
    %v331 = vpop.f32.mrb[0].mxu0
    %v332 = vadd.f32 0.0, %v331
    %v333 = vpop.f32.mrb[0].mxu0
    %334 = vdwg.mxu0
    %v335 = vld [vmem:[%s7] sm:$0xf]
    %v336 = vld [vmem:[%s7 + $0x4] sm:$0xf]
    %v337 = vld [vmem:[%s7 + $0x8] sm:$0xf]
    %v338 = vld [vmem:[%s7 + $0xc] sm:$0xf]
    %v339 = vpack.c.bf16 %v332, %v332
    %v340 = vld [vmem:[%s8] sm:$0xf]
    %v341 = vld [vmem:[%s8 + $0x4] sm:$0xf]
    %v342 = vld [vmem:[%s8 + $0x8] sm:$0xf]
    %v343 = vld [vmem:[%s8 + $0xc] sm:$0xf]
    %v348 = vunpack.c.l.b16 %v340
    %v349 = vunpack.c.l.b16 %v341
    %v350 = vunpack.c.l.b16 %v342
    %v351 = vunpack.c.l.b16 %v343
    %v352 = vpack.c.b16 %v349, %v348
    %v353 = vpack.c.b16 %v351, %v350
    %v357 = vsel %vm127, %v339, 0
    %359 = vmatprep.subr.bf16.mxu0 0
    %360 = vmatpush1.bf16.msra.mxu0 %v352
    %361 = vmatprep.subr.bf16.mxu0 0
    %362 = vmatpush1.bf16.msra.mxu0 %v353
    %363 = vmatprep.subr.bf16.mxu0 0
    %364 = vmatpush1.bf16.msra.mxu0 0
    %365 = vmatprep.subr.bf16.mxu0 0
    %366 = vmatpush1.bf16.msra.mxu0 0
    %367 = vmatprep.subr.bf16.mxu0 0
    %368 = vmatpush1.bf16.msra.mxu0 0
    %369 = vmatprep.subr.bf16.mxu0 0
    %370 = vmatpush1.bf16.msra.mxu0 0
    %371 = vmatprep.subr.bf16.mxu0 0
    %372 = vmatpush1.bf16.msra.mxu0 0
    %373 = vmatprep.subr.bf16.mxu0 0
    %374 = vmatpush1.bf16.msra.mxu0 0
    %375 = vmatprep.subr.bf16.mxu0 0
    %376 = vmatpush1.bf16.msra.mxu0 0
    %377 = vmatprep.subr.bf16.mxu0 0
    %378 = vmatpush1.bf16.msra.mxu0 0
    %379 = vmatprep.subr.bf16.mxu0 0
    %380 = vmatpush1.bf16.msra.mxu0 0
    %381 = vmatprep.subr.bf16.mxu0 0
    %382 = vmatpush1.bf16.msra.mxu0 0
    %383 = vmatprep.subr.bf16.mxu0 0
    %384 = vmatpush1.bf16.msra.mxu0 0
    %385 = vmatprep.subr.bf16.mxu0 0
    %386 = vmatpush1.bf16.msra.mxu0 0
    %387 = vmatprep.subr.bf16.mxu0 0
    %388 = vmatpush1.bf16.msra.mxu0 0
    %389 = vmatprep.subr.bf16.mxu0 0
    %390 = vmatpush1.bf16.msra.mxu0 0
    %391 = vmatprep.mubr.bf16.mxu0 0
    %392 = vmatmul.mubr.bf16.gmra.mrb[0].mxu0 %v357
    %v393 = vpop.f32.mrb[0].mxu0
    %v394 = vadd.f32 0.0, %v393
    %v395 = vpop.f32.mrb[0].mxu0
    %v396 = vpop.f32.mrb[0].mxu0
    %v397 = vpop.f32.mrb[0].mxu0
    %398 = vdwg.mxu0
    %v403 = vunpack.c.l.b16 %v335
    %v404 = vunpack.c.l.b16 %v336
    %v405 = vunpack.c.l.b16 %v337
    %v406 = vunpack.c.l.b16 %v338
    %v407 = vpack.c.b16 %v404, %v403
    %v408 = vpack.c.b16 %v406, %v405
    %411 = vmatprep.subr.bf16.mxu0 0
    %412 = vmatpush1.bf16.msra.mxu0 %v407
    %413 = vmatprep.subr.bf16.mxu0 0
    %414 = vmatpush1.bf16.msra.mxu0 %v408
    %415 = vmatprep.subr.bf16.mxu0 0
    %416 = vmatpush1.bf16.msra.mxu0 0
    %417 = vmatprep.subr.bf16.mxu0 0
    %418 = vmatpush1.bf16.msra.mxu0 0
    %419 = vmatprep.subr.bf16.mxu0 0
    %420 = vmatpush1.bf16.msra.mxu0 0
    %421 = vmatprep.subr.bf16.mxu0 0
    %422 = vmatpush1.bf16.msra.mxu0 0
    %423 = vmatprep.subr.bf16.mxu0 0
    %424 = vmatpush1.bf16.msra.mxu0 0
    %425 = vmatprep.subr.bf16.mxu0 0
    %426 = vmatpush1.bf16.msra.mxu0 0
    %427 = vmatprep.subr.bf16.mxu0 0
    %428 = vmatpush1.bf16.msra.mxu0 0
    %429 = vmatprep.subr.bf16.mxu0 0
    %430 = vmatpush1.bf16.msra.mxu0 0
    %431 = vmatprep.subr.bf16.mxu0 0
    %432 = vmatpush1.bf16.msra.mxu0 0
    %433 = vmatprep.subr.bf16.mxu0 0
    %434 = vmatpush1.bf16.msra.mxu0 0
    %435 = vmatprep.subr.bf16.mxu0 0
    %436 = vmatpush1.bf16.msra.mxu0 0
    %437 = vmatprep.subr.bf16.mxu0 0
    %438 = vmatpush1.bf16.msra.mxu0 0
    %439 = vmatprep.subr.bf16.mxu0 0
    %440 = vmatpush1.bf16.msra.mxu0 0
    %441 = vmatprep.subr.bf16.mxu0 0
    %442 = vmatpush1.bf16.msra.mxu0 0
    %443 = vmatprep.mubr.bf16.mxu0 0
    %444 = vmatmul.mubr.bf16.gmra.mrb[0].mxu0 %v129
    %v445 = vpop.f32.mrb[0].mxu0
    %v446 = vadd.f32 %v394, %v445
    %v447 = vpop.f32.mrb[0].mxu0
    %v448 = vpop.f32.mrb[0].mxu0
    %v449 = vpop.f32.mrb[0].mxu0
    %450 = vdwg.mxu0
    %v451 = vld [vmem:[#allocation10] sm:$0x1]
    %v452 = vadd.f32 %v446, %v451
    %v453 = vtanh.pop %v452
    %v454 = vpack.c.bf16 %v453, %v453
    %v455 = vld [vmem:[#allocation5] sm:$0x1]
    %v456 = vpack.c.bf16 %v455, %v455
    %v457 = vld [vmem:[%s10] sm:$0xf]
    %v458 = vld [vmem:[%s10 + $0x4] sm:$0xf]
    %v459 = vld [vmem:[%s10 + $0x8] sm:$0xf]
    %v460 = vld [vmem:[%s10 + $0xc] sm:$0xf]
    %v461 = vld [vmem:[%s11] sm:$0xf]
    %v462 = vld [vmem:[%s11 + $0x4] sm:$0xf]
    %v463 = vld [vmem:[%s11 + $0x8] sm:$0xf]
    %v464 = vld [vmem:[%s11 + $0xc] sm:$0xf]
    %v469 = vunpack.c.l.b16 %v461
    %v470 = vunpack.c.l.b16 %v462
    %v471 = vunpack.c.l.b16 %v463
    %v472 = vunpack.c.l.b16 %v464
    %v473 = vpack.c.b16 %v470, %v469
    %v474 = vpack.c.b16 %v472, %v471
    %v478 = vsel %vm127, %v456, 0
    %480 = vmatprep.subr.bf16.mxu0 0
    %481 = vmatpush1.bf16.msra.mxu0 %v473
    %482 = vmatprep.subr.bf16.mxu0 0
    %483 = vmatpush1.bf16.msra.mxu0 %v474
    %484 = vmatprep.subr.bf16.mxu0 0
    %485 = vmatpush1.bf16.msra.mxu0 0
    %486 = vmatprep.subr.bf16.mxu0 0
    %487 = vmatpush1.bf16.msra.mxu0 0
    %488 = vmatprep.subr.bf16.mxu0 0
    %489 = vmatpush1.bf16.msra.mxu0 0
    %490 = vmatprep.subr.bf16.mxu0 0
    %491 = vmatpush1.bf16.msra.mxu0 0
    %492 = vmatprep.subr.bf16.mxu0 0
    %493 = vmatpush1.bf16.msra.mxu0 0
    %494 = vmatprep.subr.bf16.mxu0 0
    %495 = vmatpush1.bf16.msra.mxu0 0
    %496 = vmatprep.subr.bf16.mxu0 0
    %497 = vmatpush1.bf16.msra.mxu0 0
    %498 = vmatprep.subr.bf16.mxu0 0
    %499 = vmatpush1.bf16.msra.mxu0 0
    %500 = vmatprep.subr.bf16.mxu0 0
    %501 = vmatpush1.bf16.msra.mxu0 0
    %502 = vmatprep.subr.bf16.mxu0 0
    %503 = vmatpush1.bf16.msra.mxu0 0
    %504 = vmatprep.subr.bf16.mxu0 0
    %505 = vmatpush1.bf16.msra.mxu0 0
    %506 = vmatprep.subr.bf16.mxu0 0
    %507 = vmatpush1.bf16.msra.mxu0 0
    %508 = vmatprep.subr.bf16.mxu0 0
    %509 = vmatpush1.bf16.msra.mxu0 0
    %510 = vmatprep.subr.bf16.mxu0 0
    %511 = vmatpush1.bf16.msra.mxu0 0
    %512 = vmatprep.mubr.bf16.mxu0 0
    %513 = vmatmul.mubr.bf16.gmra.mrb[0].mxu0 %v478
    %v514 = vpop.f32.mrb[0].mxu0
    %v515 = vadd.f32 0.0, %v514
    %v516 = vpop.f32.mrb[0].mxu0
    %v517 = vpop.f32.mrb[0].mxu0
    %v518 = vpop.f32.mrb[0].mxu0
    %519 = vdwg.mxu0
    %v524 = vunpack.c.l.b16 %v457
    %v525 = vunpack.c.l.b16 %v458
    %v526 = vunpack.c.l.b16 %v459
    %v527 = vunpack.c.l.b16 %v460
    %v528 = vpack.c.b16 %v525, %v524
    %v529 = vpack.c.b16 %v527, %v526
    %v533 = vsel %vm127, %v454, 0
    %535 = vmatprep.subr.bf16.mxu0 0
    %536 = vmatpush1.bf16.msra.mxu0 %v528
    %537 = vmatprep.subr.bf16.mxu0 0
    %538 = vmatpush1.bf16.msra.mxu0 %v529
    %539 = vmatprep.subr.bf16.mxu0 0
    %540 = vmatpush1.bf16.msra.mxu0 0
    %541 = vmatprep.subr.bf16.mxu0 0
    %542 = vmatpush1.bf16.msra.mxu0 0
    %543 = vmatprep.subr.bf16.mxu0 0
    %544 = vmatpush1.bf16.msra.mxu0 0
    %545 = vmatprep.subr.bf16.mxu0 0
    %546 = vmatpush1.bf16.msra.mxu0 0
    %547 = vmatprep.subr.bf16.mxu0 0
    %548 = vmatpush1.bf16.msra.mxu0 0
    %549 = vmatprep.subr.bf16.mxu0 0
    %550 = vmatpush1.bf16.msra.mxu0 0
    %551 = vmatprep.subr.bf16.mxu0 0
    %552 = vmatpush1.bf16.msra.mxu0 0
    %553 = vmatprep.subr.bf16.mxu0 0
    %554 = vmatpush1.bf16.msra.mxu0 0
    %555 = vmatprep.subr.bf16.mxu0 0
    %556 = vmatpush1.bf16.msra.mxu0 0
    %557 = vmatprep.subr.bf16.mxu0 0
    %558 = vmatpush1.bf16.msra.mxu0 0
    %559 = vmatprep.subr.bf16.mxu0 0
    %560 = vmatpush1.bf16.msra.mxu0 0
    %561 = vmatprep.subr.bf16.mxu0 0
    %562 = vmatpush1.bf16.msra.mxu0 0
    %563 = vmatprep.subr.bf16.mxu0 0
    %564 = vmatpush1.bf16.msra.mxu0 0
    %565 = vmatprep.subr.bf16.mxu0 0
    %566 = vmatpush1.bf16.msra.mxu0 0
    %567 = vmatprep.mubr.bf16.mxu0 0
    %568 = vmatmul.mubr.bf16.gmra.mrb[0].mxu0 %v533
    %v569 = vpop.f32.mrb[0].mxu0
    %v570 = vadd.f32 %v515, %v569
    %v571 = vpop.f32.mrb[0].mxu0
    %v572 = vpop.f32.mrb[0].mxu0
    %v573 = vpop.f32.mrb[0].mxu0
    %574 = vdwg.mxu0
    %v575 = vld [vmem:[%s12] sm:$0x1]
    %v576 = vadd.f32 %v570, %v575
    %v577 = vmul.f32 %v576, 0.5
    %v578 = vtanh.pop %v577
    %v579 = vadd.f32 %v578, 1.0
    %v580 = vmul.f32 %v579, 0.5
    %v581 = vtanh.pop %v576
    %v582 = vld [vmem:[#allocation7] sm:$0x1]
    %v584 = vlaneseq
    %v585 = vshrl.u32 %v584, 7
    %v586 = vsub.s32 0, %v585
    %v587 = vrot.slane %v582, %v586
    %588 = vrot.lane.b32.xlu0 %v587, 32
    %v589 = vpop.permute.xlu0 %588
    %v591 = vmul.f32 %v580, %v589
    %593 = vrot.lane.b32.xlu0 %v581, 64
    %v594 = vpop.permute.xlu0 %593
    %v596 = vmul.f32 %v580, %v594
    %598 = vrot.lane.b32.xlu0 %v596, 32
    %v599 = vpop.permute.xlu0 %598
    %v601 = vadd.f32 %v591, %v599
    %v602 = vtanh.pop %v601
    %604 = vrot.lane.b32.xlu0 %v602, 64
    %v605 = vpop.permute.xlu0 %604
    %v607 = vmul.f32 %v580, %v605
    %609 = vrot.lane.b32.xlu0 %v607, 32
    %v610 = vpop.permute.xlu0 %609
    %vm612 = vcmask 253952
    %613 = vst.msk [vmem:[#allocation11] sm:$0x1] %vm612, %v610
    %615 = vrot.lane.b32.xlu0 %v601, 96
    %v616 = vpop.permute.xlu0 %615
    %618 = vst.msk [vmem:[#allocation12] sm:$0x1] %vm612, %v616
    %v619 = vpack.c.bf16 %v607, %v607
    %v622 = vunpack.c.l.s4 1966171168
    %v623 = vunpack.c.0.s8 %v622
    %v624 = vlaneseq
    %v625 = vshrl.u32 %v624, 7
    %v626 = vsub.s32 %v623, %v625
    %v627 = vrot.slane %v619, %v626
    %v629 = vunpack.c.l.s4 1966171168
    %v630 = vunpack.c.0.s8 %v629
    %v631 = vlaneseq
    %v632 = vshrl.u32 %v631, 7
    %v633 = vsub.s32 %v630, %v632
    %v634 = vrot.slane %v627, %v633
    %635 = vrot.lane.b32.xlu0 %v634, 32
    %v636 = vpop.permute.xlu0 %635
    %vm638 = vcmask 253952
    %vm639 = vsmask.f32 256
    %vm640 = vmand %vm638, %vm639
    %v641 = vld [vmem:[#allocation14] sm:$0x1]
    %v642 = vsel %vm640, %v636, %v641
    %643 = vst [vmem:[#allocation14] sm:$0x1] %v642
    // Predicated region
    $region74: #{tpu_custom_call.1} parent=1 // pred_check
      _
    $region75: #{tpu_custom_call.1} parent=1 // pred_check_branch
      %645 = sbr.rel (0) target = $region77
    $region76: #{tpu_custom_call.1} parent=1 // pred_region
      %s647 = ssub.s32 16, 16
      %648 = vsyncadd [#allocation4], %s647
      %s650 = sshll.u32 [#allocation11], 4
      %s651 = int_to_ptr.vmem [resolvable:$true] %s650
      %653 = dma.vmem_to_hbm [thread:$0]  %s651, 16, %s13, [#allocation4]
    $region77: #{tpu_custom_call.1} parent=1 // pred_fallthru
      _
    // Predicated region
    $region78: #{tpu_custom_call.1} parent=1 // pred_check
      _
    $region79: #{tpu_custom_call.1} parent=1 // pred_check_branch
      %655 = sbr.rel (0) target = $region81
    $region80: #{tpu_custom_call.1} parent=1 // pred_region
      %s657 = ssub.s32 16, 16
      %658 = vsyncadd [#allocation13], %s657
      %s660 = sshll.u32 [#allocation12], 4
      %s661 = int_to_ptr.vmem [resolvable:$true] %s660
      %663 = dma.vmem_to_hbm [thread:$0]  %s661, 16, %s14, [#allocation13]
    $region81: #{tpu_custom_call.1} parent=1 // pred_fallthru
      _
    // Predicated region
    $region82: #{tpu_custom_call.1} parent=1 // pred_check
      _
    $region83: #{tpu_custom_call.1} parent=1 // pred_check_branch
      %665 = sbr.rel (0) target = $region85
    $region84: #{tpu_custom_call.1} parent=1 // pred_region
      %s667 = ssub.s32 16, 16
      %668 = vsyncadd [#allocation13], %s667
      %s670 = sshll.u32 [#allocation14], 4
      %s671 = int_to_ptr.vmem [resolvable:$true] %s670
      %673 = dma.vmem_to_hbm [thread:$0]  %s671, 16, %s15, [#allocation13]
    $region85: #{tpu_custom_call.1} parent=1 // pred_fallthru
      _
    // Predicated region
    $region86: #{tpu_custom_call.1} parent=1 // pred_check
      _
    $region87: #{tpu_custom_call.1} parent=1 // pred_check_branch
      %675 = sbr.rel (0) target = $region89
    $region88: #{tpu_custom_call.1} parent=1 // pred_region
      %676 = dma.done [#allocation4], 16
    $region89: #{tpu_custom_call.1} parent=1 // pred_fallthru
      _
    // Predicated region
    $region90: #{tpu_custom_call.1} parent=1 // pred_check
      _
    $region91: #{tpu_custom_call.1} parent=1 // pred_check_branch
      %678 = sbr.rel (0) target = $region93
    $region92: #{tpu_custom_call.1} parent=1 // pred_region
      %679 = dma.done [#allocation13], 16
    $region93: #{tpu_custom_call.1} parent=1 // pred_fallthru
      _
    // Predicated region
    $region94: #{tpu_custom_call.1} parent=1 // pred_check
      _
    $region95: #{tpu_custom_call.1} parent=1 // pred_check_branch
      %681 = sbr.rel (0) target = $region97
    $region96: #{tpu_custom_call.1} parent=1 // pred_region
      %682 = dma.done [#allocation13], 16
    $region97: #{tpu_custom_call.1} parent=1 // pred_fallthru
      _
    %683 = vsyncpa [#allocation3], 1
    %684 = vsyncpa [#allocation6], 1
    %685 = vsyncpa [#allocation9], 1
    %686 = vsyncpa [#allocation4], 1
    %687 = vsyncpa [#allocation13], 1

</llo_original>
